<compile_context>
chip_gen: v7x
topology: tpu7x:2x2x1
jax: 0.10.0
libtpu: 0.0.40
codegen_flags: <defaults>
</compile_context>

<pallas_src>
import jax
import jax.numpy as jnp
import numpy as np
from jax.experimental import pallas as pl
from jax.experimental.pallas import tpu as pltpu


def _time_shift_kernel(d_ref, x_ref, o_ref):
    # d_ref: SMEM scalar-prefetch ref, shape (1,), int32; d = shift - left >= 1
    # x_ref: (TR, T) input tile in VMEM (time on lanes)
    # o_ref: (TR, T) output tile in VMEM
    d = d_ref[0]
    x = x_ref[...]
    T = x.shape[1]
    # Lane rotation on the XLU; mod T is free insurance for the d >= T edge
    # case (the mask below zeroes the whole row then anyway).
    rolled = pltpu.roll(x, shift=d % T, axis=1)
    # Zero the first d lanes (the region that came from the left zero-padding).
    t_idx = jax.lax.broadcasted_iota(jnp.int32, x.shape, dimension=1)
    o_ref[...] = jnp.where(t_idx >= d, rolled, jnp.zeros_like(rolled))


def _ceil_to(n, m):
    return -(-n // m) * m


def _vmem_budgets():
    """Generation-aware (block_budget_bytes, vmem_limit_bytes)."""
    vmem_cap = 64 * 1024 * 1024  # conservative default (v7x per-TC VMEM)
    try:
        vmem_cap = int(getattr(pltpu.get_tpu_info(), "vmem_capacity_bytes",
                               vmem_cap))
    except Exception:
        pass
    if vmem_cap <= 64 * 1024 * 1024:
        # v7x: keep 4 x (in/out double-buffered block) well under 64 MiB.
        return 6 * 1024 * 1024, 40 * 1024 * 1024
    # v5e / v6e: 128 MiB physical VMEM -> fatter blocks, fewer grid steps.
    return 8 * 1024 * 1024, 48 * 1024 * 1024


def _select_row_tile(R, T, itemsize, block_budget, target_blocks=4):
    """Row tile: as large as the block budget allows, but split into at least
    `target_blocks` grid steps whenever R permits (so write-back overlaps the
    next read and both v7x TensorCores engage)."""
    sub = max(8, 32 // itemsize)          # sublane packing: 8 f32 / 16 bf16 / 32 i8
    row_bytes = T * itemsize
    if sub * row_bytes > block_budget:
        # TODO(synk): add a time-tiled path (second grid axis over T with a
        # shifted pl.ds read using the prefetched d) for minutes-long clips.
        raise ValueError(
            f"T={T} is too long for an untiled time axis at this block budget; "
            "tile the time dimension upstream.")
    tr_budget = max(sub, (block_budget // row_bytes) // sub * sub)
    tr_split = max(sub, _ceil_to(-(-R // target_blocks), sub))
    r_ceil = _ceil_to(R, sub)
    return min(tr_budget, tr_split, r_ceil)


def random_time_shift(x, *, shift_time, sr, key, donate_input=False):
    """JAX/Pallas equivalent of RandomTimeShift.forward.

    Notes:
      * Keep the time length T a multiple of 128 upstream in the data pipeline
        (lane-dense stores); this function never pads internally.
      * Set donate_input=True when the caller can donate x's HBM buffer; the
        output then aliases the input allocation (safe: each row is fully read
        before its block is written back).
    """
    shift = int(round(sr * shift_time))
    T = x.shape[-1]
    lead = x.shape[:-1]
    R = int(np.prod(lead)) if lead else 1

    if shift <= 0:
        # torch.randint(0, 0, ...) is ill-defined; degenerate pad => identity.
        return x

    # torch.randint(0, shift) -> left in [0, shift); prefetch d = shift - left.
    left = jax.random.randint(key, (1,), 0, shift, dtype=jnp.int32)
    d = jnp.int32(shift) - left                  # d in [1, shift]

    x2 = x.reshape(R, T)                         # time on the lane axis
    itemsize = jnp.dtype(x.dtype).itemsize
    block_budget, vmem_limit = _vmem_budgets()
    TR = _select_row_tile(R, T, itemsize, block_budget)

    out = pl.pallas_call(
        _time_shift_kernel,
        out_shape=jax.ShapeDtypeStruct((R, T), x.dtype),
        grid_spec=pltpu.PrefetchScalarGridSpec(
            num_scalar_prefetch=1,
            grid=(pl.cdiv(R, TR),),
            # Row-tiled streaming copy; time axis stays whole per block so the
            # roll needs no cross-block halo.
            in_specs=[pl.BlockSpec((TR, T), lambda i, d_ref: (i, 0))],
            out_specs=pl.BlockSpec((TR, T), lambda i, d_ref: (i, 0)),
        ),
        compiler_params=pltpu.CompilerParams(
            dimension_semantics=("parallel",),    # shard rows across TCs (v7x)
            vmem_limit_bytes=vmem_limit,
        ),
        # Call args are (d, x2): x2 is operand 1; alias it to output 0.
        input_output_aliases={1: 0} if donate_input else {},
    )(d, x2)

    return out.reshape(x.shape)


if __name__ == "__main__":
    key = jax.random.PRNGKey(0)
    k_data1, k_shift1, k_data2, k_shift2 = jax.random.split(key, 4)

    # Case 1: small audio-like shape. shift_time=0.1s @ sr=160 -> shift = 16.
    B, C, T = 2, 4, 128
    shift_time, sr = 0.1, 160
    x = jax.random.normal(k_data1, (B, C, T), dtype=jnp.float32)
    out = random_time_shift(x, shift_time=shift_time, sr=sr, key=k_shift1)
    out = jax.block_until_ready(out)

    shift = int(round(sr * shift_time))
    left = int(jax.random.randint(k_shift1, (1,), 0, shift, dtype=jnp.int32)[0])
    ref = jnp.pad(x, ((0, 0), (0, 0), (shift, shift)))[..., left:left + T]
    np.testing.assert_allclose(np.asarray(out), np.asarray(ref), rtol=0, atol=0)
    assert out.shape == x.shape and out.dtype == x.dtype

    # Case 2: slightly larger shape so the row grid has >= 4 blocks, exercising
    # the multi-block pipelined path and the >=4-blocks row-tile cap.
    B2, C2, T2 = 4, 8, 256
    shift_time2, sr2 = 0.2, 160                  # shift = 32
    x2 = jax.random.normal(k_data2, (B2, C2, T2), dtype=jnp.float32)
    out2 = random_time_shift(x2, shift_time=shift_time2, sr=sr2, key=k_shift2)
    out2 = jax.block_until_ready(out2)

    shift2 = int(round(sr2 * shift_time2))
    left2 = int(jax.random.randint(k_shift2, (1,), 0, shift2, dtype=jnp.int32)[0])
    ref2 = jnp.pad(x2, ((0, 0), (0, 0), (shift2, shift2)))[..., left2:left2 + T2]
    np.testing.assert_allclose(np.asarray(out2), np.asarray(ref2), rtol=0, atol=0)
    assert out2.shape == x2.shape and out2.dtype == x2.dtype

    print("KERNEL_OK")
</pallas_src>

<mosaic_0001>
module attributes {stable_mosaic.version = 11 : i64} {
  func.func @_time_shift_kernel(%arg0: i32, %arg1: memref<1xi32, #tpu.memory_space<smem>>, %arg2: memref<8x128xf32, #tpu.memory_space<vmem>>, %arg3: memref<8x128xf32, #tpu.memory_space<vmem>>) attributes {dimension_semantics = [#tpu.dimension_semantics<parallel>], iteration_bounds = array<i64: 1>, scalar_prefetch = 1 : i64, scratch_operands = 0 : i64, tpu.core_type = #tpu.core_type<tc>, window_params = [{transform_indices = @transform_0, window_bounds = array<i64: 8, 128>}, {transform_indices = @transform_1, window_bounds = array<i64: 8, 128>}]} {
    %c0 = arith.constant 0 : index
    %0 = memref.load %arg1[%c0] : memref<1xi32, #tpu.memory_space<smem>>
    %c0_0 = arith.constant 0 : index
    %c0_1 = arith.constant 0 : index
    %1 = vector.load %arg2[%c0_0, %c0_1] : memref<8x128xf32, #tpu.memory_space<vmem>>, vector<8x128xf32>
    %c128_i32 = arith.constant 128 : i32
    %c0_i32 = arith.constant 0 : i32
    %2 = arith.cmpi eq, %c128_i32, %c0_i32 : i32
    %c1_i32 = arith.constant 1 : i32
    %3 = arith.select %2, %c1_i32, %c128_i32 : i32
    %4 = arith.remsi %0, %3 : i32
    %c0_i32_2 = arith.constant 0 : i32
    %5 = arith.cmpi ne, %4, %c0_i32_2 : i32
    %c0_i32_3 = arith.constant 0 : i32
    %6 = arith.cmpi slt, %4, %c0_i32_3 : i32
    %c0_i32_4 = arith.constant 0 : i32
    %7 = arith.cmpi slt, %3, %c0_i32_4 : i32
    %8 = arith.xori %6, %7 : i1
    %9 = arith.andi %8, %5 : i1
    %10 = arith.addi %4, %3 : i32
    %11 = arith.select %9, %10, %4 : i32
    %12 = tpu.dynamic_rotate %1 by %11 dim 1 : vector<8x128xf32>, i32 -> vector<8x128xf32>
    %13 = tpu.iota {dimensions = array<i32: 1>} : vector<8x128xi32>
    %14 = vector.broadcast %0 : i32 to vector<8x128xi32>
    %15 = arith.cmpi sge, %13, %14 : vector<8x128xi32>
    %cst = arith.constant 0.000000e+00 : f32
    %16 = vector.broadcast %cst : f32 to vector<8x128xf32>
    %17 = arith.select %15, %12, %16 : vector<8x128xi1>, vector<8x128xf32>
    %c0_5 = arith.constant 0 : index
    %c0_6 = arith.constant 0 : index
    %18 = vector.load %arg3[%c0_5, %c0_6] : memref<8x128xf32, #tpu.memory_space<vmem>>, vector<8x128xf32>
    tpu.vector_store %arg3[%c0_5, %c0_6], %17 {strides = array<i32>} : memref<8x128xf32, #tpu.memory_space<vmem>>, vector<8x128xf32>,
    return
  }
  func.func @transform_0(%arg0: i32, %arg1: memref<1xi32, #tpu.memory_space<smem>>) -> (i32, i32) {
    %c0_i32 = arith.constant 0 : i32
    %c0_i32_0 = arith.constant 0 : i32
    return %arg0, %c0_i32 : i32, i32
  }
  func.func @transform_1(%arg0: i32, %arg1: memref<1xi32, #tpu.memory_space<smem>>) -> (i32, i32) {
    %c0_i32 = arith.constant 0 : i32
    %c0_i32_0 = arith.constant 0 : i32
    return %arg0, %c0_i32 : i32, i32
  }
}

</mosaic_0001>

<llo_original>
// kernel: tpu_custom_call.1
$region0: #{tpu_custom_call.1}
  #allocation0 [shape = 'u32[]', space=smem, size = 0x4, offset = 0x4, fixed_abs, tag = 'smem constant byte address 0x4 - core index']
  #allocation1 [shape = 'u32[144,128]{1,0:T(1,128)}', space=vmem, size = 0x12000, scoped, tag = 'internal scratch']
  #allocation2 [shape = 's32[1]{0}', space=sflag, size = 0x4, scoped, tag = 'scoped memory for tpu_custom_call.1']
  #allocation3 [shape = 's32[1]{0:T(128)S(6)}', space=smem, size = 0x200, scoped, tag = 'prefetched SMEM operand 0']
  %s0 = inlined_call_operand.<no memory space> [shape: s32[1], index: 0, kind: input, shape index: {}]
  %s1 = inlined_call_operand.hbm [shape: f32[8,128], index: 1, kind: input, shape index: {}]
  %s2 = inlined_call_operand.hbm [shape: f32[8,128], index: 2, kind: output, shape index: {}]
  %s3 = sld [smem:[#allocation0]]
  $region18: #{tpu_custom_call.1} parent=0
    _
  %s5 = ssub.s32 1, %s3
  %s6 = scalar_select 0, %s5, %s3
  %7 = sst [smem:[#allocation3]] %s0
  $region1: #{tpu_custom_call.1} parent=0
    #allocation4 [shape = 'u8[4096]{0}', space=vmem, size = 0x1000, scoped, tag = 'input window, operand 1, single buffered']
    #allocation5 [shape = 's32[1]{0}', space=sflag, size = 0x4, scoped, tag = 'scoped memory for tpu_custom_call.1']
    #allocation6 [shape = 's32[1]{0}', space=sflag, size = 0x4, scoped, tag = 'scoped memory for tpu_custom_call.1']
    #allocation7 [shape = 'u8[4096]{0}', space=vmem, size = 0x1000, scoped, tag = 'output window, operand 0, single buffered']
    %8 = vsyncpa [#allocation5], 0
    %9 = vsyncpa [#allocation6], 0
    // Predicated region
    $region2: #{tpu_custom_call.1} parent=1 // pred_check
      _
    $region3: #{tpu_custom_call.1} parent=1 // pred_check_branch
      %11 = sbr.rel (0) target = $region5
    $region4: #{tpu_custom_call.1} parent=1 // pred_region
      %s13 = ssub.s32 128, 128
      %14 = vsyncadd [#allocation5], %s13
      %s16 = sshll.u32 [#allocation4], 4
      %s17 = int_to_ptr.vmem [resolvable:$true] %s16
      %19 = dma.hbm_to_vmem [thread:$0]  %s1, 128, %s17, [#allocation5]
    $region5: #{tpu_custom_call.1} parent=1 // pred_fallthru
      _
    // Predicated region
    $region6: #{tpu_custom_call.1} parent=1 // pred_check
      _
    $region7: #{tpu_custom_call.1} parent=1 // pred_check_branch
      %21 = sbr.rel (0) target = $region9
    $region8: #{tpu_custom_call.1} parent=1 // pred_region
      %22 = dma.done [#allocation5], 128
    $region9: #{tpu_custom_call.1} parent=1 // pred_fallthru
      _
    %s23 = sld [smem:[#allocation3]]
    %v24 = vld [vmem:[#allocation4] sm:$0xff]
    %p25 = scmp.lt.s32.totalorder %s23, 0
    %s26 = ssub.s32 0, %s23
    %s27 = scalar_select %p25, %s26, %s23
    %s28 = sand.u32 %s27, 127
    %s29 = ssub.s32 0, %s28
    %s30 = scalar_select %p25, %s29, %s28
    %p31 = scmp.ne.s32.totalorder %s30, 0
    %p32 = scmp.lt.s32.totalorder %s30, 0
    %p33 = pnand %p32, %p31
    %p34 = pneg %p33
    %s35 = sadd.s32 %s30, 128
    %s36 = scalar_select %p34, %s35, %s30
    %s37 = sand.u32 %s36, 127
    %s38 = sand.u32 %s37, 127
    %39 = vrot.lane.b32.xlu0 %v24, %s38
    %v40 = vpop.permute.xlu0 %39
    %v41 = vlaneseq
    %v42 = vand.u32 %v41, 127
    %v43 = vstv %s23
    %vm44 = vcmp.ge.s32.totalorder %v42, %v43
    %v45 = vsel %vm44, %v40, 0.0
    %46 = vst [vmem:[#allocation7] sm:$0xff] %v45
    // Predicated region
    $region10: #{tpu_custom_call.1} parent=1 // pred_check
      _
    $region11: #{tpu_custom_call.1} parent=1 // pred_check_branch
      %48 = sbr.rel (0) target = $region13
    $region12: #{tpu_custom_call.1} parent=1 // pred_region
      %s50 = ssub.s32 128, 128
      %51 = vsyncadd [#allocation6], %s50
      %s53 = sshll.u32 [#allocation7], 4
      %s54 = int_to_ptr.vmem [resolvable:$true] %s53
      %56 = dma.vmem_to_hbm [thread:$0]  %s54, 128, %s2, [#allocation6]
    $region13: #{tpu_custom_call.1} parent=1 // pred_fallthru
      _
    // Predicated region
    $region14: #{tpu_custom_call.1} parent=1 // pred_check
      _
    $region15: #{tpu_custom_call.1} parent=1 // pred_check_branch
      %58 = sbr.rel (0) target = $region17
    $region16: #{tpu_custom_call.1} parent=1 // pred_region
      %59 = dma.done [#allocation6], 128
    $region17: #{tpu_custom_call.1} parent=1 // pred_fallthru
      _
    %60 = vsyncpa [#allocation5], 1
    %61 = vsyncpa [#allocation6], 1

</llo_original>
